<compile_context>
chip_gen: v7x
topology: tpu7x:2x2x1
jax: 0.10.0
libtpu: 0.0.40
codegen_flags: <defaults>
</compile_context>

<pallas_src>
import jax
import jax.numpy as jnp
from jax import lax
from jax.experimental import pallas as pl
from jax.experimental.pallas import tpu as pltpu

DILATIONS = (1, 2, 4, 8)
PAD = max(DILATIONS)          # max spatial offset of any tap


def _unique_taps():
    """Ordered unique (dy, dx) pixel offsets of all 5 convolutions."""
    taps = [(0, 0)]           # 1x1 conv + the four 3x3 centre taps merge here
    for d in DILATIONS:
        for ky in range(3):
            for kx in range(3):
                off = (d * (ky - 1), d * (kx - 1))
                if off not in taps:
                    taps.append(off)
    return tuple(taps)


TAPS = _unique_taps()
NUM_TAPS = len(TAPS)          # 33  ->  K = 33 * Cin


def _round_up(x, m):
    return (x + m - 1) // m * m


def _pick_tile_h(h, wp):
    """Largest band height dividing H with M = tile_h*Wp 128-aligned and <= 1024."""
    best = None
    for t in range(1, h + 1):
        if h % t != 0:
            continue
        m = t * wp
        if m % 128 == 0 and m <= 1024:
            best = t
    return best if best is not None else h   # fallback: full image (full-dim block)


def _stack_weights(w1, w3, w5, w9, w15):
    """Stacked (Cout, K) weight matrix, K = NUM_TAPS*Cin, k = tap*Cin + ci.

    Weights sharing a pixel offset (the 1x1 tap and the four 3x3 centre taps)
    are summed exactly in f32 before the bf16 cast.
    """
    c_out, c_in = w1.shape[0], w1.shape[1]
    acc = {off: jnp.zeros((c_out, c_in), jnp.float32) for off in TAPS}
    acc[(0, 0)] = acc[(0, 0)] + w1[:, :, 0, 0].astype(jnp.float32)
    for w, d in zip((w3, w5, w9, w15), DILATIONS):
        wf = w.astype(jnp.float32)
        for ky in range(3):
            for kx in range(3):
                off = (d * (ky - 1), d * (kx - 1))
                acc[off] = acc[off] + wf[:, :, ky, kx]
    return jnp.concatenate([acc[off] for off in TAPS], axis=1)   # (Cout, K)


def _make_kernel(c_in, wp, win_len, m_len):
    """Build the band kernel for a fixed (Cin, Wp, window, M) configuration."""

    def kernel(x_ref, w_ref, b_ref, out_ref, slab_ref):
        # x_ref   : (1, Cin, L)   bf16  flattened zero-padded image (lane = h*Wp + w)
        # w_ref   : (Cout, K)     bf16  stacked per-tap weights, K = NUM_TAPS*Cin
        # b_ref   : (Cout, 1)     f32   bias of the 1x1 conv
        # out_ref : (1, Cout, M)  f32   M = tile_h*Wp output pixels of this band (lane-dense)
        # slab_ref: (K, M)        bf16  VMEM scratch for the im2col slab
        band = pl.program_id(1)
        win_start = band * m_len
        if m_len % 128 == 0:
            win_start = pl.multiple_of(win_start, 128)

        # Load the halo window for the whole band ONCE (single dynamic slice);
        # every tap below is a static contiguous lane slice of it.
        win = x_ref[0, :, pl.ds(win_start, win_len)]          # (Cin, WIN)

        for t, (dy, dx) in enumerate(TAPS):                   # 33 static slices
            off = (PAD + dy) * wp + PAD + dx                  # static offset
            slab_ref[t * c_in:(t + 1) * c_in, :] = win[:, off:off + m_len]

        # One fat (Cout, K) @ (K, M) MXU matmul, f32 accumulation, lane-dense M.
        y = jnp.dot(w_ref[...], slab_ref[...], preferred_element_type=jnp.float32)
        out_ref[...] = (y + b_ref[...])[None]

    return kernel


@jax.jit
def large_conv_pallas(x_nchw, w1, b1, w3, w5, w9, w15):
    """Forward pass of LargeConv. x_nchw: (N, Cin, H, W) f32 -> (N, Cout, H, W) f32."""
    n, c_in, h, w = x_nchw.shape
    c_out = w1.shape[0]
    k = NUM_TAPS * c_in
    hp, wp = h + 2 * PAD, w + 2 * PAD

    tile_h = _pick_tile_h(h, wp)
    m_len = tile_h * wp                                   # output pixels per band (lanes)
    win_len = _round_up((tile_h + 2 * PAD) * wp + 2 * PAD, 128)
    l = _round_up(max(hp * wp + 2 * PAD, (h - tile_h) * wp + win_len), 128)

    # ---- one-off NCHW-native glue (no transposes): pad, flatten, over-pad ----
    x_pad = jnp.pad(x_nchw.astype(jnp.bfloat16),
                    ((0, 0), (0, 0), (PAD, PAD), (PAD, PAD)))     # (N, Cin, Hp, Wp)
    x_flat = x_pad.reshape(n, c_in, hp * wp)
    x_flat = jnp.pad(x_flat, ((0, 0), (0, 0), (PAD, l - hp * wp - PAD)))  # (N, Cin, L)

    wstack = _stack_weights(w1, w3, w5, w9, w15).astype(jnp.bfloat16)     # (Cout, K)
    bias = b1.astype(jnp.float32).reshape(c_out, 1)

    grid = (n, h // tile_h)
    kernel = _make_kernel(c_in, wp, win_len, m_len)

    out_flat = pl.pallas_call(
        kernel,
        grid=grid,
        in_specs=[
            # Full flattened padded image per batch element; constant along the
            # band axis -> DMA'd once per image and reused for every band.
            pl.BlockSpec((1, c_in, l), lambda bi, ri: (bi, 0, 0)),
            pl.BlockSpec((c_out, k), lambda bi, ri: (0, 0)),
            pl.BlockSpec((c_out, 1), lambda bi, ri: (0, 0)),
        ],
        out_specs=pl.BlockSpec((1, c_out, m_len), lambda bi, ri: (bi, 0, ri)),
        out_shape=jax.ShapeDtypeStruct((n, c_out, h * wp), jnp.float32),
        scratch_shapes=[pltpu.VMEM((k, m_len), jnp.bfloat16)],
        compiler_params=pltpu.CompilerParams(
            dimension_semantics=("parallel", "parallel"),   # megacore-shardable
            vmem_limit_bytes=48 * 1024 * 1024,              # v7x-safe (64 MiB physical)
        ),
        cost_estimate=pl.CostEstimate(
            flops=2 * n * h * wp * k * c_out,
            transcendentals=0,
            bytes_accessed=(n * c_in * l * 2 + c_out * k * 2 + c_out * 4
                            + n * c_out * h * wp * 4),
        ),
    )(x_flat, wstack, bias)

    # (N, Cout, H*Wp) is already NCHW-flattened: just drop the padded columns.
    return out_flat.reshape(n, c_out, h, wp)[:, :, :, PAD:PAD + w]


def large_conv_ref(x_nchw, w1, b1, w3, w5, w9, w15):
    """Pure-JAX f32 reference using lax.conv_general_dilated (NCHW/OIHW)."""
    dn = ('NCHW', 'OIHW', 'NCHW')
    y = lax.conv_general_dilated(x_nchw, w1, (1, 1), 'VALID', dimension_numbers=dn)
    y = y + b1[None, :, None, None]
    for wgt, d in ((w3, 1), (w5, 2), (w9, 4), (w15, 8)):
        y = y + lax.conv_general_dilated(x_nchw, wgt, (1, 1), ((d, d), (d, d)),
                                         rhs_dilation=(d, d), dimension_numbers=dn)
    return y


if __name__ == "__main__":
    # Small deterministic problem: batch=2, c_in=4, c_out=4, 16x16 spatial.
    N, C_IN, C_OUT, H, W = 2, 4, 4, 16, 16

    key = jax.random.PRNGKey(0)
    kx, k1, kb, k3, k5, k9, k15 = jax.random.split(key, 7)

    x = jax.random.normal(kx, (N, C_IN, H, W), dtype=jnp.float32)
    # Parameters in PyTorch OIHW layout.
    w1 = 0.1 * jax.random.normal(k1, (C_OUT, C_IN, 1, 1), dtype=jnp.float32)
    b1 = 0.1 * jax.random.normal(kb, (C_OUT,), dtype=jnp.float32)
    w3 = 0.1 * jax.random.normal(k3, (C_OUT, C_IN, 3, 3), dtype=jnp.float32)
    w5 = 0.1 * jax.random.normal(k5, (C_OUT, C_IN, 3, 3), dtype=jnp.float32)
    w9 = 0.1 * jax.random.normal(k9, (C_OUT, C_IN, 3, 3), dtype=jnp.float32)
    w15 = 0.1 * jax.random.normal(k15, (C_OUT, C_IN, 3, 3), dtype=jnp.float32)

    y_kernel = jax.block_until_ready(large_conv_pallas(x, w1, b1, w3, w5, w9, w15))
    y_ref = jax.block_until_ready(large_conv_ref(x, w1, b1, w3, w5, w9, w15))

    assert y_kernel.shape == (N, C_OUT, H, W)
    # bf16 MXU operands, f32 accumulation -> ~1e-2 absolute error at this scale.
    err = float(jnp.max(jnp.abs(y_kernel - y_ref)))
    assert jnp.allclose(y_kernel, y_ref, atol=5e-2, rtol=5e-2), err

    # Targeted single-branch test (review concern): only the dilation-8 conv is
    # active, exercising the outer tap offsets without the centre-tap merge.
    z1, zb, z3 = jnp.zeros_like(w1), jnp.zeros_like(b1), jnp.zeros_like(w3)
    y_kernel2 = jax.block_until_ready(large_conv_pallas(x, z1, zb, z3, z3, z3, w15))
    y_ref2 = jax.block_until_ready(large_conv_ref(x, z1, zb, z3, z3, z3, w15))
    err2 = float(jnp.max(jnp.abs(y_kernel2 - y_ref2)))
    assert jnp.allclose(y_kernel2, y_ref2, atol=5e-2, rtol=5e-2), err2

    print("KERNEL_OK")
</pallas_src>

<mosaic_0001>
module attributes {stable_mosaic.version = 11 : i64} {
  func.func @kernel(%arg0: i32, %arg1: i32, %arg2: memref<1x4x1152xbf16, #tpu.memory_space<vmem>>, %arg3: memref<4x132xbf16, #tpu.memory_space<vmem>>, %arg4: memref<4x1xf32, #tpu.memory_space<vmem>>, %arg5: memref<1x4x512xf32, #tpu.memory_space<vmem>>, %arg6: memref<132x512xbf16, #tpu.memory_space<vmem>>) attributes {dimension_semantics = [#tpu.dimension_semantics<parallel>, #tpu.dimension_semantics<parallel>], iteration_bounds = array<i64: 2, 1>, scalar_prefetch = 0 : i64, scratch_operands = 1 : i64, tpu.core_type = #tpu.core_type<tc>, window_params = [{transform_indices = @transform_0, window_bounds = array<i64: 1, 4, 1152>}, {pipeline_mode = #tpu.pipeline_mode<synchronous>, transform_indices = @transform_1, window_bounds = array<i64: 4, 132>}, {pipeline_mode = #tpu.pipeline_mode<synchronous>, transform_indices = @transform_2, window_bounds = array<i64: 4, 1>}, {transform_indices = @transform_3, window_bounds = array<i64: 1, 4, 512>}]} {
    %c512_i32 = arith.constant 512 : i32
    %0 = arith.muli %arg1, %c512_i32 : i32
    %1 = tpu.assume_multiple %0, 128 : i32
    %c0 = arith.constant 0 : index
    %c0_0 = arith.constant 0 : index
    %2 = arith.index_cast %1 : i32 to index
    %3 = vector.load %arg2[%c0, %c0_0, %2] : memref<1x4x1152xbf16, #tpu.memory_space<vmem>>, vector<1x4x1152xbf16>
    %4 = vector.shape_cast %3 : vector<1x4x1152xbf16> to vector<4x1152xbf16>
    %5 = vector.extract_strided_slice %4 {offsets = [0, 264], sizes = [4, 512], strides = [1, 1]} : vector<4x1152xbf16> to vector<4x512xbf16>
    %c0_1 = arith.constant 0 : index
    %c0_2 = arith.constant 0 : index
    %6 = vector.load %arg6[%c0_1, %c0_2] : memref<132x512xbf16, #tpu.memory_space<vmem>>, vector<4x512xbf16>
    tpu.vector_store %arg6[%c0_1, %c0_2], %5 {strides = array<i32>} : memref<132x512xbf16, #tpu.memory_space<vmem>>, vector<4x512xbf16>,
    %7 = vector.extract_strided_slice %4 {offsets = [0, 231], sizes = [4, 512], strides = [1, 1]} : vector<4x1152xbf16> to vector<4x512xbf16>
    %c4 = arith.constant 4 : index
    %c0_3 = arith.constant 0 : index
    %8 = vector.load %arg6[%c4, %c0_3] : memref<132x512xbf16, #tpu.memory_space<vmem>>, vector<4x512xbf16>
    tpu.vector_store %arg6[%c4, %c0_3], %7 {strides = array<i32>} : memref<132x512xbf16, #tpu.memory_space<vmem>>, vector<4x512xbf16>,
    %9 = vector.extract_strided_slice %4 {offsets = [0, 232], sizes = [4, 512], strides = [1, 1]} : vector<4x1152xbf16> to vector<4x512xbf16>
    %c8 = arith.constant 8 : index
    %c0_4 = arith.constant 0 : index
    %10 = vector.load %arg6[%c8, %c0_4] : memref<132x512xbf16, #tpu.memory_space<vmem>>, vector<4x512xbf16>
    tpu.vector_store %arg6[%c8, %c0_4], %9 {strides = array<i32>} : memref<132x512xbf16, #tpu.memory_space<vmem>>, vector<4x512xbf16>,
    %11 = vector.extract_strided_slice %4 {offsets = [0, 233], sizes = [4, 512], strides = [1, 1]} : vector<4x1152xbf16> to vector<4x512xbf16>
    %c12 = arith.constant 12 : index
    %c0_5 = arith.constant 0 : index
    %12 = vector.load %arg6[%c12, %c0_5] : memref<132x512xbf16, #tpu.memory_space<vmem>>, vector<4x512xbf16>
    tpu.vector_store %arg6[%c12, %c0_5], %11 {strides = array<i32>} : memref<132x512xbf16, #tpu.memory_space<vmem>>, vector<4x512xbf16>,
    %13 = vector.extract_strided_slice %4 {offsets = [0, 263], sizes = [4, 512], strides = [1, 1]} : vector<4x1152xbf16> to vector<4x512xbf16>
    %c16 = arith.constant 16 : index
    %c0_6 = arith.constant 0 : index
    %14 = vector.load %arg6[%c16, %c0_6] : memref<132x512xbf16, #tpu.memory_space<vmem>>, vector<4x512xbf16>
    tpu.vector_store %arg6[%c16, %c0_6], %13 {strides = array<i32>} : memref<132x512xbf16, #tpu.memory_space<vmem>>, vector<4x512xbf16>,
    %15 = vector.extract_strided_slice %4 {offsets = [0, 265], sizes = [4, 512], strides = [1, 1]} : vector<4x1152xbf16> to vector<4x512xbf16>
    %c20 = arith.constant 20 : index
    %c0_7 = arith.constant 0 : index
    %16 = vector.load %arg6[%c20, %c0_7] : memref<132x512xbf16, #tpu.memory_space<vmem>>, vector<4x512xbf16>
    tpu.vector_store %arg6[%c20, %c0_7], %15 {strides = array<i32>} : memref<132x512xbf16, #tpu.memory_space<vmem>>, vector<4x512xbf16>,
    %17 = vector.extract_strided_slice %4 {offsets = [0, 295], sizes = [4, 512], strides = [1, 1]} : vector<4x1152xbf16> to vector<4x512xbf16>
    %c24 = arith.constant 24 : index
    %c0_8 = arith.constant 0 : index
    %18 = vector.load %arg6[%c24, %c0_8] : memref<132x512xbf16, #tpu.memory_space<vmem>>, vector<4x512xbf16>
    tpu.vector_store %arg6[%c24, %c0_8], %17 {strides = array<i32>} : memref<132x512xbf16, #tpu.memory_space<vmem>>, vector<4x512xbf16>,
    %19 = vector.extract_strided_slice %4 {offsets = [0, 296], sizes = [4, 512], strides = [1, 1]} : vector<4x1152xbf16> to vector<4x512xbf16>
    %c28 = arith.constant 28 : index
    %c0_9 = arith.constant 0 : index
    %20 = vector.load %arg6[%c28, %c0_9] : memref<132x512xbf16, #tpu.memory_space<vmem>>, vector<4x512xbf16>
    tpu.vector_store %arg6[%c28, %c0_9], %19 {strides = array<i32>} : memref<132x512xbf16, #tpu.memory_space<vmem>>, vector<4x512xbf16>,
    %21 = vector.extract_strided_slice %4 {offsets = [0, 297], sizes = [4, 512], strides = [1, 1]} : vector<4x1152xbf16> to vector<4x512xbf16>
    %c32 = arith.constant 32 : index
    %c0_10 = arith.constant 0 : index
    %22 = vector.load %arg6[%c32, %c0_10] : memref<132x512xbf16, #tpu.memory_space<vmem>>, vector<4x512xbf16>
    tpu.vector_store %arg6[%c32, %c0_10], %21 {strides = array<i32>} : memref<132x512xbf16, #tpu.memory_space<vmem>>, vector<4x512xbf16>,
    %23 = vector.extract_strided_slice %4 {offsets = [0, 198], sizes = [4, 512], strides = [1, 1]} : vector<4x1152xbf16> to vector<4x512xbf16>
    %c36 = arith.constant 36 : index
    %c0_11 = arith.constant 0 : index
    %24 = vector.load %arg6[%c36, %c0_11] : memref<132x512xbf16, #tpu.memory_space<vmem>>, vector<4x512xbf16>
    tpu.vector_store %arg6[%c36, %c0_11], %23 {strides = array<i32>} : memref<132x512xbf16, #tpu.memory_space<vmem>>, vector<4x512xbf16>,
    %25 = vector.extract_strided_slice %4 {offsets = [0, 200], sizes = [4, 512], strides = [1, 1]} : vector<4x1152xbf16> to vector<4x512xbf16>
    %c40 = arith.constant 40 : index
    %c0_12 = arith.constant 0 : index
    %26 = vector.load %arg6[%c40, %c0_12] : memref<132x512xbf16, #tpu.memory_space<vmem>>, vector<4x512xbf16>
    tpu.vector_store %arg6[%c40, %c0_12], %25 {strides = array<i32>} : memref<132x512xbf16, #tpu.memory_space<vmem>>, vector<4x512xbf16>,
    %27 = vector.extract_strided_slice %4 {offsets = [0, 202], sizes = [4, 512], strides = [1, 1]} : vector<4x1152xbf16> to vector<4x512xbf16>
    %c44 = arith.constant 44 : index
    %c0_13 = arith.constant 0 : index
    %28 = vector.load %arg6[%c44, %c0_13] : memref<132x512xbf16, #tpu.memory_space<vmem>>, vector<4x512xbf16>
    tpu.vector_store %arg6[%c44, %c0_13], %27 {strides = array<i32>} : memref<132x512xbf16, #tpu.memory_space<vmem>>, vector<4x512xbf16>,
    %29 = vector.extract_strided_slice %4 {offsets = [0, 262], sizes = [4, 512], strides = [1, 1]} : vector<4x1152xbf16> to vector<4x512xbf16>
    %c48 = arith.constant 48 : index
    %c0_14 = arith.constant 0 : index
    %30 = vector.load %arg6[%c48, %c0_14] : memref<132x512xbf16, #tpu.memory_space<vmem>>, vector<4x512xbf16>
    tpu.vector_store %arg6[%c48, %c0_14], %29 {strides = array<i32>} : memref<132x512xbf16, #tpu.memory_space<vmem>>, vector<4x512xbf16>,
    %31 = vector.extract_strided_slice %4 {offsets = [0, 266], sizes = [4, 512], strides = [1, 1]} : vector<4x1152xbf16> to vector<4x512xbf16>
    %c52 = arith.constant 52 : index
    %c0_15 = arith.constant 0 : index
    %32 = vector.load %arg6[%c52, %c0_15] : memref<132x512xbf16, #tpu.memory_space<vmem>>, vector<4x512xbf16>
    tpu.vector_store %arg6[%c52, %c0_15], %31 {strides = array<i32>} : memref<132x512xbf16, #tpu.memory_space<vmem>>, vector<4x512xbf16>,
    %33 = vector.extract_strided_slice %4 {offsets = [0, 326], sizes = [4, 512], strides = [1, 1]} : vector<4x1152xbf16> to vector<4x512xbf16>
    %c56 = arith.constant 56 : index
    %c0_16 = arith.constant 0 : index
    %34 = vector.load %arg6[%c56, %c0_16] : memref<132x512xbf16, #tpu.memory_space<vmem>>, vector<4x512xbf16>
    tpu.vector_store %arg6[%c56, %c0_16], %33 {strides = array<i32>} : memref<132x512xbf16, #tpu.memory_space<vmem>>, vector<4x512xbf16>,
    %35 = vector.extract_strided_slice %4 {offsets = [0, 328], sizes = [4, 512], strides = [1, 1]} : vector<4x1152xbf16> to vector<4x512xbf16>
    %c60 = arith.constant 60 : index
    %c0_17 = arith.constant 0 : index
    %36 = vector.load %arg6[%c60, %c0_17] : memref<132x512xbf16, #tpu.memory_space<vmem>>, vector<4x512xbf16>
    tpu.vector_store %arg6[%c60, %c0_17], %35 {strides = array<i32>} : memref<132x512xbf16, #tpu.memory_space<vmem>>, vector<4x512xbf16>,
    %37 = vector.extract_strided_slice %4 {offsets = [0, 330], sizes = [4, 512], strides = [1, 1]} : vector<4x1152xbf16> to vector<4x512xbf16>
    %c64 = arith.constant 64 : index
    %c0_18 = arith.constant 0 : index
    %38 = vector.load %arg6[%c64, %c0_18] : memref<132x512xbf16, #tpu.memory_space<vmem>>, vector<4x512xbf16>
    tpu.vector_store %arg6[%c64, %c0_18], %37 {strides = array<i32>} : memref<132x512xbf16, #tpu.memory_space<vmem>>, vector<4x512xbf16>,
    %39 = vector.extract_strided_slice %4 {offsets = [0, 132], sizes = [4, 512], strides = [1, 1]} : vector<4x1152xbf16> to vector<4x512xbf16>
    %c68 = arith.constant 68 : index
    %c0_19 = arith.constant 0 : index
    %40 = vector.load %arg6[%c68, %c0_19] : memref<132x512xbf16, #tpu.memory_space<vmem>>, vector<4x512xbf16>
    tpu.vector_store %arg6[%c68, %c0_19], %39 {strides = array<i32>} : memref<132x512xbf16, #tpu.memory_space<vmem>>, vector<4x512xbf16>,
    %41 = vector.extract_strided_slice %4 {offsets = [0, 136], sizes = [4, 512], strides = [1, 1]} : vector<4x1152xbf16> to vector<4x512xbf16>
    %c72 = arith.constant 72 : index
    %c0_20 = arith.constant 0 : index
    %42 = vector.load %arg6[%c72, %c0_20] : memref<132x512xbf16, #tpu.memory_space<vmem>>, vector<4x512xbf16>
    tpu.vector_store %arg6[%c72, %c0_20], %41 {strides = array<i32>} : memref<132x512xbf16, #tpu.memory_space<vmem>>, vector<4x512xbf16>,
    %43 = vector.extract_strided_slice %4 {offsets = [0, 140], sizes = [4, 512], strides = [1, 1]} : vector<4x1152xbf16> to vector<4x512xbf16>
    %c76 = arith.constant 76 : index
    %c0_21 = arith.constant 0 : index
    %44 = vector.load %arg6[%c76, %c0_21] : memref<132x512xbf16, #tpu.memory_space<vmem>>, vector<4x512xbf16>
    tpu.vector_store %arg6[%c76, %c0_21], %43 {strides = array<i32>} : memref<132x512xbf16, #tpu.memory_space<vmem>>, vector<4x512xbf16>,
    %45 = vector.extract_strided_slice %4 {offsets = [0, 260], sizes = [4, 512], strides = [1, 1]} : vector<4x1152xbf16> to vector<4x512xbf16>
    %c80 = arith.constant 80 : index
    %c0_22 = arith.constant 0 : index
    %46 = vector.load %arg6[%c80, %c0_22] : memref<132x512xbf16, #tpu.memory_space<vmem>>, vector<4x512xbf16>
    tpu.vector_store %arg6[%c80, %c0_22], %45 {strides = array<i32>} : memref<132x512xbf16, #tpu.memory_space<vmem>>, vector<4x512xbf16>,
    %47 = vector.extract_strided_slice %4 {offsets = [0, 268], sizes = [4, 512], strides = [1, 1]} : vector<4x1152xbf16> to vector<4x512xbf16>
    %c84 = arith.constant 84 : index
    %c0_23 = arith.constant 0 : index
    %48 = vector.load %arg6[%c84, %c0_23] : memref<132x512xbf16, #tpu.memory_space<vmem>>, vector<4x512xbf16>
    tpu.vector_store %arg6[%c84, %c0_23], %47 {strides = array<i32>} : memref<132x512xbf16, #tpu.memory_space<vmem>>, vector<4x512xbf16>,
    %49 = vector.extract_strided_slice %4 {offsets = [0, 388], sizes = [4, 512], strides = [1, 1]} : vector<4x1152xbf16> to vector<4x512xbf16>
    %c88 = arith.constant 88 : index
    %c0_24 = arith.constant 0 : index
    %50 = vector.load %arg6[%c88, %c0_24] : memref<132x512xbf16, #tpu.memory_space<vmem>>, vector<4x512xbf16>
    tpu.vector_store %arg6[%c88, %c0_24], %49 {strides = array<i32>} : memref<132x512xbf16, #tpu.memory_space<vmem>>, vector<4x512xbf16>,
    %51 = vector.extract_strided_slice %4 {offsets = [0, 392], sizes = [4, 512], strides = [1, 1]} : vector<4x1152xbf16> to vector<4x512xbf16>
    %c92 = arith.constant 92 : index
    %c0_25 = arith.constant 0 : index
    %52 = vector.load %arg6[%c92, %c0_25] : memref<132x512xbf16, #tpu.memory_space<vmem>>, vector<4x512xbf16>
    tpu.vector_store %arg6[%c92, %c0_25], %51 {strides = array<i32>} : memref<132x512xbf16, #tpu.memory_space<vmem>>, vector<4x512xbf16>,
    %53 = vector.extract_strided_slice %4 {offsets = [0, 396], sizes = [4, 512], strides = [1, 1]} : vector<4x1152xbf16> to vector<4x512xbf16>
    %c96 = arith.constant 96 : index
    %c0_26 = arith.constant 0 : index
    %54 = vector.load %arg6[%c96, %c0_26] : memref<132x512xbf16, #tpu.memory_space<vmem>>, vector<4x512xbf16>
    tpu.vector_store %arg6[%c96, %c0_26], %53 {strides = array<i32>} : memref<132x512xbf16, #tpu.memory_space<vmem>>, vector<4x512xbf16>,
    %55 = vector.extract_strided_slice %4 {offsets = [0, 0], sizes = [4, 512], strides = [1, 1]} : vector<4x1152xbf16> to vector<4x512xbf16>
    %c100 = arith.constant 100 : index
    %c0_27 = arith.constant 0 : index
    %56 = vector.load %arg6[%c100, %c0_27] : memref<132x512xbf16, #tpu.memory_space<vmem>>, vector<4x512xbf16>
    tpu.vector_store %arg6[%c100, %c0_27], %55 {strides = array<i32>} : memref<132x512xbf16, #tpu.memory_space<vmem>>, vector<4x512xbf16>,
    %57 = vector.extract_strided_slice %4 {offsets = [0, 8], sizes = [4, 512], strides = [1, 1]} : vector<4x1152xbf16> to vector<4x512xbf16>
    %c104 = arith.constant 104 : index
    %c0_28 = arith.constant 0 : index
    %58 = vector.load %arg6[%c104, %c0_28] : memref<132x512xbf16, #tpu.memory_space<vmem>>, vector<4x512xbf16>
    tpu.vector_store %arg6[%c104, %c0_28], %57 {strides = array<i32>} : memref<132x512xbf16, #tpu.memory_space<vmem>>, vector<4x512xbf16>,
    %59 = vector.extract_strided_slice %4 {offsets = [0, 16], sizes = [4, 512], strides = [1, 1]} : vector<4x1152xbf16> to vector<4x512xbf16>
    %c108 = arith.constant 108 : index
    %c0_29 = arith.constant 0 : index
    %60 = vector.load %arg6[%c108, %c0_29] : memref<132x512xbf16, #tpu.memory_space<vmem>>, vector<4x512xbf16>
    tpu.vector_store %arg6[%c108, %c0_29], %59 {strides = array<i32>} : memref<132x512xbf16, #tpu.memory_space<vmem>>, vector<4x512xbf16>,
    %61 = vector.extract_strided_slice %4 {offsets = [0, 256], sizes = [4, 512], strides = [1, 1]} : vector<4x1152xbf16> to vector<4x512xbf16>
    %c112 = arith.constant 112 : index
    %c0_30 = arith.constant 0 : index
    %62 = vector.load %arg6[%c112, %c0_30] : memref<132x512xbf16, #tpu.memory_space<vmem>>, vector<4x512xbf16>
    tpu.vector_store %arg6[%c112, %c0_30], %61 {strides = array<i32>} : memref<132x512xbf16, #tpu.memory_space<vmem>>, vector<4x512xbf16>,
    %63 = vector.extract_strided_slice %4 {offsets = [0, 272], sizes = [4, 512], strides = [1, 1]} : vector<4x1152xbf16> to vector<4x512xbf16>
    %c116 = arith.constant 116 : index
    %c0_31 = arith.constant 0 : index
    %64 = vector.load %arg6[%c116, %c0_31] : memref<132x512xbf16, #tpu.memory_space<vmem>>, vector<4x512xbf16>
    tpu.vector_store %arg6[%c116, %c0_31], %63 {strides = array<i32>} : memref<132x512xbf16, #tpu.memory_space<vmem>>, vector<4x512xbf16>,
    %65 = vector.extract_strided_slice %4 {offsets = [0, 512], sizes = [4, 512], strides = [1, 1]} : vector<4x1152xbf16> to vector<4x512xbf16>
    %c120 = arith.constant 120 : index
    %c0_32 = arith.constant 0 : index
    %66 = vector.load %arg6[%c120, %c0_32] : memref<132x512xbf16, #tpu.memory_space<vmem>>, vector<4x512xbf16>
    tpu.vector_store %arg6[%c120, %c0_32], %65 {strides = array<i32>} : memref<132x512xbf16, #tpu.memory_space<vmem>>, vector<4x512xbf16>,
    %67 = vector.extract_strided_slice %4 {offsets = [0, 520], sizes = [4, 512], strides = [1, 1]} : vector<4x1152xbf16> to vector<4x512xbf16>
    %c124 = arith.constant 124 : index
    %c0_33 = arith.constant 0 : index
    %68 = vector.load %arg6[%c124, %c0_33] : memref<132x512xbf16, #tpu.memory_space<vmem>>, vector<4x512xbf16>
    tpu.vector_store %arg6[%c124, %c0_33], %67 {strides = array<i32>} : memref<132x512xbf16, #tpu.memory_space<vmem>>, vector<4x512xbf16>,
    %69 = vector.extract_strided_slice %4 {offsets = [0, 528], sizes = [4, 512], strides = [1, 1]} : vector<4x1152xbf16> to vector<4x512xbf16>
    %c128 = arith.constant 128 : index
    %c0_34 = arith.constant 0 : index
    %70 = vector.load %arg6[%c128, %c0_34] : memref<132x512xbf16, #tpu.memory_space<vmem>>, vector<4x512xbf16>
    tpu.vector_store %arg6[%c128, %c0_34], %69 {strides = array<i32>} : memref<132x512xbf16, #tpu.memory_space<vmem>>, vector<4x512xbf16>,
    %c0_35 = arith.constant 0 : index
    %c0_36 = arith.constant 0 : index
    %71 = vector.load %arg3[%c0_35, %c0_36] : memref<4x132xbf16, #tpu.memory_space<vmem>>, vector<4x132xbf16>
    %c0_37 = arith.constant 0 : index
    %c0_38 = arith.constant 0 : index
    %72 = vector.load %arg6[%c0_37, %c0_38] : memref<132x512xbf16, #tpu.memory_space<vmem>>, vector<132x512xbf16>
    %cst = arith.constant dense<0.000000e+00> : vector<4x512xf32>
    %73 = tpu.matmul %71, %72, %cst {dimension_numbers = #tpu.dot_dimension_numbers<[1], [0], [0], [1], [0, 0, 1, 1], [], []>} : vector<4x132xbf16>, vector<132x512xbf16>, vector<4x512xf32> -> vector<4x512xf32>
    %c0_39 = arith.constant 0 : index
    %c0_40 = arith.constant 0 : index
    %74 = vector.load %arg4[%c0_39, %c0_40] : memref<4x1xf32, #tpu.memory_space<vmem>>, vector<4x1xf32>
    %75 = vector.broadcast %74 : vector<4x1xf32> to vector<4x512xf32>
    %76 = arith.addf %73, %75 : vector<4x512xf32>
    %77 = vector.shape_cast %76 : vector<4x512xf32> to vector<1x4x512xf32>
    %c0_41 = arith.constant 0 : index
    %c0_42 = arith.constant 0 : index
    %c0_43 = arith.constant 0 : index
    %78 = vector.load %arg5[%c0_41, %c0_42, %c0_43] : memref<1x4x512xf32, #tpu.memory_space<vmem>>, vector<1x4x512xf32>
    tpu.vector_store %arg5[%c0_41, %c0_42, %c0_43], %77 {strides = array<i32>} : memref<1x4x512xf32, #tpu.memory_space<vmem>>, vector<1x4x512xf32>,
    return
  }
  func.func @transform_0(%arg0: i32, %arg1: i32) -> (i32, i32, i32) {
    %c0_i32 = arith.constant 0 : i32
    %c0_i32_0 = arith.constant 0 : i32
    %c0_i32_1 = arith.constant 0 : i32
    return %arg0, %c0_i32, %c0_i32_0 : i32, i32, i32
  }
  func.func @transform_1(%arg0: i32, %arg1: i32) -> (i32, i32) {
    %c0_i32 = arith.constant 0 : i32
    %c0_i32_0 = arith.constant 0 : i32
    %c0_i32_1 = arith.constant 0 : i32
    return %c0_i32, %c0_i32_0 : i32, i32
  }
  func.func @transform_2(%arg0: i32, %arg1: i32) -> (i32, i32) {
    %c0_i32 = arith.constant 0 : i32
    %c0_i32_0 = arith.constant 0 : i32
    %c0_i32_1 = arith.constant 0 : i32
    return %c0_i32, %c0_i32_0 : i32, i32
  }
  func.func @transform_3(%arg0: i32, %arg1: i32) -> (i32, i32, i32) {
    %c0_i32 = arith.constant 0 : i32
    %c0_i32_0 = arith.constant 0 : i32
    return %arg0, %c0_i32, %arg1 : i32, i32, i32
  }
}

</mosaic_0001>

<llo_original>
// kernel: large_conv_pallas.1
$region0: #{large_conv_pallas.1}
  #allocation0 [shape = 'u32[]', space=smem, size = 0x4, offset = 0x4, fixed_abs, tag = 'smem constant byte address 0x4 - core index']
  #allocation1 [shape = 'u32[144,128]{1,0:T(1,128)}', space=vmem, size = 0x12000, scoped, tag = 'internal scratch']
  #allocation2 [shape = 'bf16[132,512]{1,0:T(8,128)(2,1)}', space=vmem, size = 0x22000, scoped, tag = 'scratch operand']
  %s0 = inlined_call_operand.vmem [shape: bf16[2,4,1152], index: 0, kind: input, shape index: {}]
  %s1 = inlined_call_operand.vmem [shape: bf16[4,132], index: 1, kind: input, shape index: {}]
  %s2 = inlined_call_operand.vmem [shape: f32[4,1], index: 2, kind: input, shape index: {}]
  %s3 = inlined_call_operand.vmem [shape: f32[2,4,512], index: 3, kind: output, shape index: {}]
  %s4 = sld [smem:[#allocation0]]
  $region45: #{large_conv_pallas.1} parent=0
    _
  %s6 = ssub.s32 1, %s4
  %s7 = scalar_select 0, %s6, %s4
  loop: start=0, step=1, limit=4
  $region2: #{large_conv_pallas.1} parent=0 // loop_pre_header
    _
  $region3: #{large_conv_pallas.1} parent=0 // loop_header
    %s9 = sphi 0, %s13
    %p10 = scmp.ge.s32.totalorder %s9, 4
    %s16 = sphi 0, %s28
    %s17 = sphi 0, %s24
    %s18 = sphi 0, %s16
    %s19 = sphi 0, %s17
    %s20 = sphi 0, %s18
    %s21 = sphi 0, %s19
    %s31 = sphi 0, %s33
    %s34 = sphi 0, %s31
    %s35 = sphi 0, %s34
    %s51 = sphi 0, %s35
    %s55 = sphi 0, %s55
    %s57 = sphi 0, %s55
    %s58 = sphi 0, %s57
    %s72 = sphi 0, %s58
    %s76 = sphi 0, %s76
    %s78 = sphi 0, %s76
    %s79 = sphi 0, %s78
    %s93 = sphi 0, %s79
    %s101 = sphi 0, %s103
    %s104 = sphi 0, %s101
    %s105 = sphi 0, %s104
    %s121 = sphi 0, %s105
  $region4: #{large_conv_pallas.1} parent=0 // loop_header_branch
    %12 = sbr.rel (%p10) target = $region8
  $region5: #{large_conv_pallas.1} parent=0 // loop_body
    %s14 = ssub.s32 %s9, 1
    %s15 = ssub.s32 %s9, 2
    %s22 = sadd.s32 1, %s17
    %p23 = scmp.ge.s32.totalorder %s22, 1
    %s24 = scalar_select %p23, 0, %s22
    %s25 = sadd.s32 1, %s16
    %s26 = scalar_select %p23, %s25, %s16
    %p27 = scmp.ge.s32.totalorder %s26, 2
    %s28 = scalar_select %p27, 0, %s26
    %s29 = ssub.s32 %s16, %s28
    %p30 = scmp.eq.s32.totalorder %s29, 0
    %s32 = sadd.s32 %s31, 1
    %s33 = scalar_select %p30, %s31, %s32
    %p36 = pneg %p30
    %p37 = scmp.eq.s32.totalorder %s9, 1
    %p38 = por %p36, %p37
    %p39 = scmp.ne.s32.totalorder %s31, %s34
    %p40 = scmp.eq.s32.totalorder %s9, 0
    %p41 = por %p39, %p40
    %p42 = scmp.ne.s32.totalorder %s31, %s34
    %p43 = scmp.eq.s32.totalorder %s14, 1
    %p44 = por %p42, %p43
    %p45 = scmp.ne.s32.totalorder %s34, %s35
    %p46 = scmp.eq.s32.totalorder %s14, 0
    %p47 = por %p45, %p46
    %p48 = scmp.ne.s32.totalorder %s34, %s35
    %p49 = scmp.eq.s32.totalorder %s15, 1
    %p50 = por %p48, %p49
    %p52 = scmp.ne.s32.totalorder %s35, %s51
    %p53 = scmp.eq.s32.totalorder %s15, 0
    %p54 = por %p52, %p53
    %s56 = sadd.s32 %s55, 1
    %p59 = scmp.eq.s32.totalorder %s9, 1
    %p60 = scmp.ne.s32.totalorder %s55, %s57
    %p61 = scmp.eq.s32.totalorder %s9, 0
    %p62 = por %p60, %p61
    %p63 = scmp.ne.s32.totalorder %s55, %s57
    %p64 = scmp.eq.s32.totalorder %s14, 1
    %p65 = por %p63, %p64
    %p66 = scmp.ne.s32.totalorder %s57, %s58
    %p67 = scmp.eq.s32.totalorder %s14, 0
    %p68 = por %p66, %p67
    %p69 = scmp.ne.s32.totalorder %s57, %s58
    %p70 = scmp.eq.s32.totalorder %s15, 1
    %p71 = por %p69, %p70
    %p73 = scmp.ne.s32.totalorder %s58, %s72
    %p74 = scmp.eq.s32.totalorder %s15, 0
    %p75 = por %p73, %p74
    %s77 = sadd.s32 %s76, 1
    %p80 = scmp.eq.s32.totalorder %s9, 1
    %p81 = scmp.ne.s32.totalorder %s76, %s78
    %p82 = scmp.eq.s32.totalorder %s9, 0
    %p83 = por %p81, %p82
    %p84 = scmp.ne.s32.totalorder %s76, %s78
    %p85 = scmp.eq.s32.totalorder %s14, 1
    %p86 = por %p84, %p85
    %p87 = scmp.ne.s32.totalorder %s78, %s79
    %p88 = scmp.eq.s32.totalorder %s14, 0
    %p89 = por %p87, %p88
    %p90 = scmp.ne.s32.totalorder %s78, %s79
    %p91 = scmp.eq.s32.totalorder %s15, 1
    %p92 = por %p90, %p91
    %p94 = scmp.ne.s32.totalorder %s79, %s93
    %p95 = scmp.eq.s32.totalorder %s15, 0
    %p96 = por %p94, %p95
    %s97 = ssub.s32 %s16, %s28
    %s98 = ssub.s32 %s17, %s24
    %s99 = sor.u32 %s97, %s98
    %p100 = scmp.eq.s32.totalorder %s99, 0
    %s102 = sadd.s32 %s101, 1
    %s103 = scalar_select %p100, %s101, %s102
    %p106 = pneg %p100
    %p107 = scmp.eq.s32.totalorder %s9, 1
    %p108 = por %p106, %p107
    %p109 = scmp.ne.s32.totalorder %s101, %s104
    %p110 = scmp.eq.s32.totalorder %s9, 0
    %p111 = por %p109, %p110
    %p112 = scmp.ne.s32.totalorder %s101, %s104
    %p113 = scmp.eq.s32.totalorder %s14, 1
    %p114 = por %p112, %p113
    %p115 = scmp.ne.s32.totalorder %s104, %s105
    %p116 = scmp.eq.s32.totalorder %s14, 0
    %p117 = por %p115, %p116
    %p118 = scmp.ne.s32.totalorder %s104, %s105
    %p119 = scmp.eq.s32.totalorder %s15, 1
    %p120 = por %p118, %p119
    %p122 = scmp.ne.s32.totalorder %s105, %s121
    %p123 = scmp.eq.s32.totalorder %s15, 0
    %p124 = por %p122, %p123
    %p125 = scmp.le.s32.totalorder 1, %s9
    %p126 = scmp.lt.s32.totalorder %s9, 3
    %p127 = pnand %p125, %p126
    %p128 = pneg %p127
    // Predicated region
    $region9: #{large_conv_pallas.1} parent=5 // pred_check
      _
    $region10: #{large_conv_pallas.1} parent=5 // pred_check_branch
      %130 = sbr.rel (%p127) target = $region12
    $region11: #{large_conv_pallas.1} parent=5 // pred_region
      %s131 = ssub.s32 %s9, 1
      // Predicated region
      $region13: #{large_conv_pallas.1} parent=11 // pred_check
        %p132 = pneg %p68
      $region14: #{large_conv_pallas.1} parent=11 // pred_check_branch
        %134 = sbr.rel (%p132) target = $region16
      $region15: #{large_conv_pallas.1} parent=11 // pred_region
        _
      $region16: #{large_conv_pallas.1} parent=11 // pred_fallthru
        _
      // Predicated region
      $region17: #{large_conv_pallas.1} parent=11 // pred_check
        %p135 = pneg %p89
      $region18: #{large_conv_pallas.1} parent=11 // pred_check_branch
        %137 = sbr.rel (%p135) target = $region20
      $region19: #{large_conv_pallas.1} parent=11 // pred_region
        _
      $region20: #{large_conv_pallas.1} parent=11 // pred_fallthru
        _
    $region12: #{large_conv_pallas.1} parent=5 // pred_fallthru
      _
    %p138 = scmp.lt.s32.totalorder %s9, 2
    // Predicated region
    $region21: #{large_conv_pallas.1} parent=5 // pred_check
      %p139 = pneg %p138
    $region22: #{large_conv_pallas.1} parent=5 // pred_check_branch
      %141 = sbr.rel (%p139) target = $region24
    $region23: #{large_conv_pallas.1} parent=5 // pred_region
      // Predicated region
      $region25: #{large_conv_pallas.1} parent=23 // pred_check
        %p142 = pneg %p41
      $region26: #{large_conv_pallas.1} parent=23 // pred_check_branch
        %144 = sbr.rel (%p142) target = $region28
      $region27: #{large_conv_pallas.1} parent=23 // pred_region
        %p145 = scmp.lt.s32.totalorder %s16, 1
        %s146 = scalar_select %p145, %s16, 1
        %s147 = smul.addr %s146, 9
        %s148 = smul.addr %s147, 2
        %s149 = scalar_lea.vmem %s0, %s148
      $region28: #{large_conv_pallas.1} parent=23 // pred_fallthru
        _
    $region24: #{large_conv_pallas.1} parent=5 // pred_fallthru
      _
    %p150 = scmp.le.s32.totalorder 1, %s9
    %p151 = scmp.lt.s32.totalorder %s9, 3
    %p152 = pnand %p150, %p151
    %p153 = pneg %p152
    // Predicated region
    $region29: #{large_conv_pallas.1} parent=5 // pred_check
      _
    $region30: #{large_conv_pallas.1} parent=5 // pred_check_branch
      %155 = sbr.rel (%p152) target = $region32
    $region31: #{large_conv_pallas.1} parent=5 // pred_region
      %s156 = ssub.s32 %s9, 1
      %p157 = scmp.lt.s32.totalorder %s18, 1
      %s158 = scalar_select %p157, %s18, 1
      %s159 = smul.addr %s158, 9
      %s160 = smul.addr %s159, 2
      %s161 = scalar_lea.vmem %s0, %s160
      %p162 = pneg %p47
      %p163 = pneg %p44
      %p164 = pneg %p68
      %p165 = pneg %p65
      %p166 = pneg %p89
      %p167 = pneg %p86
      %p168 = pneg %p117
      %p169 = pneg %p114
      %s170 = smul.u32 4, %s19
      %p171 = scmp.lt.s32.totalorder %s18, 1
      %s172 = scalar_select %p171, %s18, 1
      %p173 = scmp.lt.s32.totalorder %s170, 3
      %s174 = scalar_select %p173, %s170, 3
      %s175 = smul.addr %s172, 4
      %s176 = sadd.s32 %s174, %s175
      %s177 = smul.addr %s176, 4
      %s178 = scalar_lea.vmem %s3, %s177
      %p179 = scmp.lt.s32.totalorder %s18, 1
      %s180 = scalar_select %p179, %s18, 1
      %s181 = smul.addr %s180, 9
      %s182 = smul.addr %s181, 2
      %s183 = scalar_lea.vmem %s0, %s182
      %s184 = smul.u32 4, %s19
      %p185 = scmp.lt.s32.totalorder %s18, 1
      %s186 = scalar_select %p185, %s18, 1
      %p187 = scmp.lt.s32.totalorder %s184, 3
      %s188 = scalar_select %p187, %s184, 3
      %s189 = smul.addr %s186, 4
      %s190 = sadd.s32 %s188, %s189
      %s191 = smul.addr %s190, 4
      %s192 = scalar_lea.vmem %s3, %s191
      %s193 = smul.u32 4, %s19
      %s195 = smul.u32 %s19, 512
      %s196 = sshra.s32 %s195, 7
      %s197 = sand.u32 %s195, 127
      %s198 = smul.addr %s196, 2
      %s199 = scalar_lea.vmem %s183, %s198
      %v200 = vld [vmem:[%s199] sm:$0xff]
      %v201 = vld [vmem:[%s199 + $0x8] sm:$0xff]
      %v202 = vld [vmem:[%s199 + $0x10] sm:$0x3]
      %v205 = vcombine.high %v200, %v200
      %v207 = vunpack.c.l.s4 1983009808
      %v208 = vunpack.c.0.s8 %v207
      %v209 = vlaneseq
      %v210 = vshrl.u32 %v209, 7
      %v211 = vsub.s32 %v208, %v210
      %v212 = vrot.slane %v205, %v211
      %v213 = vcombine.high %v201, %v201
      %v215 = vunpack.c.l.s4 1983009808
      %v216 = vunpack.c.0.s8 %v215
      %v217 = vlaneseq
      %v218 = vshrl.u32 %v217, 7
      %v219 = vsub.s32 %v216, %v218
      %v220 = vrot.slane %v201, %v219
      %v222 = vunpack.c.l.s4 1983009808
      %v223 = vunpack.c.0.s8 %v222
      %v224 = vlaneseq
      %v225 = vshrl.u32 %v224, 7
      %v226 = vsub.s32 %v223, %v225
      %v227 = vrot.slane %v213, %v226
      %228 = vrot.lane.b32.xlu0 %v212, 120
      %v229 = vpop.permute.xlu0 %228
      %230 = vrot.lane.b32.xlu0 %v220, 120
      %v231 = vpop.permute.xlu0 %230
      %232 = vrot.lane.b32.xlu0 %v227, 120
      %v233 = vpop.permute.xlu0 %232
      %v234 = vrot.slane %v229, 4
      %v235 = vrot.slane %v231, 4
      %v236 = vrot.slane %v233, 4
      %vm237 = vcmask 1043456
      %v238 = vsel %vm237, %v234, %v235
      %vm239 = vcmask 982016
      %v240 = vsel %vm239, %v229, %v238
      %v241 = vsel %vm237, %v235, %v236
      %v242 = vsel %vm239, %v231, %v241
      %245 = vst [vmem:[#allocation2] sm:$0x33] %v240
      %246 = vst [vmem:[#allocation2 + $0x8] sm:$0x33] %v242
      %v247 = vcombine.low %v200, %v200
      %v249 = vunpack.c.l.s4 1983009808
      %v250 = vunpack.c.0.s8 %v249
      %v251 = vlaneseq
      %v252 = vshrl.u32 %v251, 7
      %v253 = vsub.s32 %v250, %v252
      %v254 = vrot.slane %v247, %v253
      %v256 = vunpack.c.l.s4 1983009808
      %v257 = vunpack.c.0.s8 %v256
      %v258 = vlaneseq
      %v259 = vshrl.u32 %v258, 7
      %v260 = vsub.s32 %v257, %v259
      %v261 = vrot.slane %v200, %v260
      %v262 = vcombine.low %v201, %v201
      %v264 = vunpack.c.l.s4 1983009808
      %v265 = vunpack.c.0.s8 %v264
      %v266 = vlaneseq
      %v267 = vshrl.u32 %v266, 7
      %v268 = vsub.s32 %v265, %v267
      %v269 = vrot.slane %v262, %v268
      %270 = vrot.lane.b32.xlu0 %v254, 25
      %v271 = vpop.permute.xlu0 %270
      %272 = vrot.lane.b32.xlu0 %v261, 25
      %v273 = vpop.permute.xlu0 %272
      %274 = vrot.lane.b32.xlu0 %v269, 25
      %v275 = vpop.permute.xlu0 %274
      %v276 = vrot.slane %v271, 4
      %v277 = vrot.slane %v273, 4
      %v278 = vrot.slane %v275, 4
      %v279 = vsel %vm237, %v276, %v277
      %vm280 = vcmask 203776
      %v281 = vsel %vm280, %v279, %v273
      %v282 = vsel %vm237, %v277, %v278
      %v283 = vsel %vm280, %v282, %v275
      %286 = vst [vmem:[#allocation2] sm:$0xcc] %v281
      %287 = vst [vmem:[#allocation2 + $0x8] sm:$0xcc] %v283
      %288 = vrot.lane.b32.xlu0 %v261, 24
      %v289 = vpop.permute.xlu0 %288
      %290 = vrot.lane.b32.xlu0 %v212, 24
      %v291 = vpop.permute.xlu0 %290
      %292 = vrot.lane.b32.xlu0 %v220, 24
      %v293 = vpop.permute.xlu0 %292
      %v294 = vrot.slane %v289, 4
      %v295 = vrot.slane %v291, 4
      %v296 = vrot.slane %v293, 4
      %v297 = vsel %vm237, %v294, %v295
      %vm298 = vcmask 195584
      %v299 = vsel %vm298, %v297, %v291
      %v300 = vsel %vm237, %v295, %v296
      %v301 = vsel %vm298, %v300, %v293
      %304 = vst [vmem:[#allocation2 + $0x10] sm:$0x33] %v299
      %305 = vst [vmem:[#allocation2 + $0x18] sm:$0x33] %v301
      %306 = vrot.lane.b32.xlu0 %v254, 23
      %v307 = vpop.permute.xlu0 %306
      %308 = vrot.lane.b32.xlu0 %v261, 23
      %v309 = vpop.permute.xlu0 %308
      %310 = vrot.lane.b32.xlu0 %v269, 23
      %v311 = vpop.permute.xlu0 %310
      %v312 = vrot.slane %v307, 4
      %v313 = vrot.slane %v309, 4
      %v314 = vrot.slane %v311, 4
      %v315 = vsel %vm237, %v312, %v313
      %vm316 = vcmask 187392
      %v317 = vsel %vm316, %v315, %v309
      %v318 = vsel %vm237, %v313, %v314
      %v319 = vsel %vm316, %v318, %v311
      %322 = vst [vmem:[#allocation2 + $0x10] sm:$0xcc] %v317
      %323 = vst [vmem:[#allocation2 + $0x18] sm:$0xcc] %v319
      %324 = vrot.lane.b32.xlu0 %v212, 121
      %v325 = vpop.permute.xlu0 %324
      %326 = vrot.lane.b32.xlu0 %v220, 121
      %v327 = vpop.permute.xlu0 %326
      %328 = vrot.lane.b32.xlu0 %v227, 121
      %v329 = vpop.permute.xlu0 %328
      %v330 = vrot.slane %v325, 4
      %v331 = vrot.slane %v327, 4
      %v332 = vrot.slane %v329, 4
      %v333 = vsel %vm237, %v330, %v331
      %vm334 = vcmask 990208
      %v335 = vsel %vm334, %v325, %v333
      %v336 = vsel %vm237, %v331, %v332
      %v337 = vsel %vm334, %v327, %v336
      %340 = vst [vmem:[#allocation2 + $0x20] sm:$0x33] %v335
      %341 = vst [vmem:[#allocation2 + $0x28] sm:$0x33] %v337
      %342 = vrot.lane.b32.xlu0 %v261, 119
      %v343 = vpop.permute.xlu0 %342
      %344 = vrot.lane.b32.xlu0 %v269, 119
      %v345 = vpop.permute.xlu0 %344
      %346 = vrot.lane.b32.xlu0 %v220, 119
      %v347 = vpop.permute.xlu0 %346
      %v348 = vrot.slane %v343, 4
      %v349 = vrot.slane %v345, 4
      %v350 = vrot.slane %v347, 4
      %v351 = vsel %vm237, %v348, %v349
      %vm352 = vcmask 973824
      %v353 = vsel %vm352, %v343, %v351
      %v354 = vsel %vm237, %v349, %v350
      %v355 = vsel %vm352, %v345, %v354
      %358 = vst [vmem:[#allocation2 + $0x20] sm:$0xcc] %v353
      %359 = vst [vmem:[#allocation2 + $0x28] sm:$0xcc] %v355
      %360 = vrot.lane.b32.xlu0 %v212, 89
      %v361 = vpop.permute.xlu0 %360
      %362 = vrot.lane.b32.xlu0 %v220, 89
      %v363 = vpop.permute.xlu0 %362
      %364 = vrot.lane.b32.xlu0 %v227, 89
      %v365 = vpop.permute.xlu0 %364
      %v366 = vrot.slane %v361, 4
      %v367 = vrot.slane %v363, 4
      %v368 = vrot.slane %v365, 4
      %v369 = vsel %vm237, %v366, %v367
      %vm370 = vcmask 728064
      %v371 = vsel %vm370, %v361, %v369
      %v372 = vsel %vm237, %v367, %v368
      %v373 = vsel %vm370, %v363, %v372
      %376 = vst [vmem:[#allocation2 + $0x30] sm:$0x33] %v371
      %377 = vst [vmem:[#allocation2 + $0x38] sm:$0x33] %v373
      %378 = vrot.lane.b32.xlu0 %v261, 88
      %v379 = vpop.permute.xlu0 %378
      %380 = vrot.lane.b32.xlu0 %v269, 88
      %v381 = vpop.permute.xlu0 %380
      %382 = vrot.lane.b32.xlu0 %v220, 88
      %v383 = vpop.permute.xlu0 %382
      %v384 = vrot.slane %v379, 4
      %v385 = vrot.slane %v381, 4
      %v386 = vrot.slane %v383, 4
      %v387 = vsel %vm237, %v384, %v385
      %vm388 = vcmask 719872
      %v389 = vsel %vm388, %v379, %v387
      %v390 = vsel %vm237, %v385, %v386
      %v391 = vsel %vm388, %v381, %v390
      %394 = vst [vmem:[#allocation2 + $0x30] sm:$0xcc] %v389
      %395 = vst [vmem:[#allocation2 + $0x38] sm:$0xcc] %v391
      %396 = vrot.lane.b32.xlu0 %v212, 87
      %v397 = vpop.permute.xlu0 %396
      %398 = vrot.lane.b32.xlu0 %v220, 87
      %v399 = vpop.permute.xlu0 %398
      %400 = vrot.lane.b32.xlu0 %v227, 87
      %v401 = vpop.permute.xlu0 %400
      %v402 = vrot.slane %v397, 4
      %v403 = vrot.slane %v399, 4
      %v404 = vrot.slane %v401, 4
      %v405 = vsel %vm237, %v402, %v403
      %vm406 = vcmask 711680
      %v407 = vsel %vm406, %v397, %v405
      %v408 = vsel %vm237, %v403, %v404
      %v409 = vsel %vm406, %v399, %v408
      %412 = vst [vmem:[#allocation2 + $0x40] sm:$0x33] %v407
      %413 = vst [vmem:[#allocation2 + $0x48] sm:$0x33] %v409
      %414 = vrot.lane.b32.xlu0 %v254, 58
      %v415 = vpop.permute.xlu0 %414
      %416 = vrot.lane.b32.xlu0 %v261, 58
      %v417 = vpop.permute.xlu0 %416
      %418 = vrot.lane.b32.xlu0 %v269, 58
      %v419 = vpop.permute.xlu0 %418
      %v420 = vrot.slane %v415, 4
      %v421 = vrot.slane %v417, 4
      %v422 = vrot.slane %v419, 4
      %v423 = vsel %vm237, %v420, %v421
      %vm424 = vcmask 474112
      %v425 = vsel %vm424, %v423, %v417
      %v426 = vsel %vm237, %v421, %v422
      %v427 = vsel %vm424, %v426, %v419
      %430 = vst [vmem:[#allocation2 + $0x40] sm:$0xcc] %v425
      %431 = vst [vmem:[#allocation2 + $0x48] sm:$0xcc] %v427
      %432 = vrot.lane.b32.xlu0 %v261, 56
      %v433 = vpop.permute.xlu0 %432
      %434 = vrot.lane.b32.xlu0 %v212, 56
      %v435 = vpop.permute.xlu0 %434
      %436 = vrot.lane.b32.xlu0 %v220, 56
      %v437 = vpop.permute.xlu0 %436
      %v438 = vrot.slane %v433, 4
      %v439 = vrot.slane %v435, 4
      %v440 = vrot.slane %v437, 4
      %v441 = vsel %vm237, %v438, %v439
      %vm442 = vcmask 457728
      %v443 = vsel %vm442, %v441, %v435
      %v444 = vsel %vm237, %v439, %v440
      %v445 = vsel %vm442, %v444, %v437
      %448 = vst [vmem:[#allocation2 + $0x50] sm:$0x33] %v443
      %449 = vst [vmem:[#allocation2 + $0x58] sm:$0x33] %v445
      %450 = vrot.lane.b32.xlu0 %v254, 54
      %v451 = vpop.permute.xlu0 %450
      %452 = vrot.lane.b32.xlu0 %v261, 54
      %v453 = vpop.permute.xlu0 %452
      %454 = vrot.lane.b32.xlu0 %v269, 54
      %v455 = vpop.permute.xlu0 %454
      %v456 = vrot.slane %v451, 4
      %v457 = vrot.slane %v453, 4
      %v458 = vrot.slane %v455, 4
      %v459 = vsel %vm237, %v456, %v457
      %vm460 = vcmask 441344
      %v461 = vsel %vm460, %v459, %v453
      %v462 = vsel %vm237, %v457, %v458
      %v463 = vsel %vm460, %v462, %v455
      %466 = vst [vmem:[#allocation2 + $0x50] sm:$0xcc] %v461
      %467 = vst [vmem:[#allocation2 + $0x58] sm:$0xcc] %v463
      %468 = vrot.lane.b32.xlu0 %v212, 122
      %v469 = vpop.permute.xlu0 %468
      %470 = vrot.lane.b32.xlu0 %v220, 122
      %v471 = vpop.permute.xlu0 %470
      %472 = vrot.lane.b32.xlu0 %v227, 122
      %v473 = vpop.permute.xlu0 %472
      %v474 = vrot.slane %v469, 4
      %v475 = vrot.slane %v471, 4
      %v476 = vrot.slane %v473, 4
      %v477 = vsel %vm237, %v474, %v475
      %vm478 = vcmask 998400
      %v479 = vsel %vm478, %v469, %v477
      %v480 = vsel %vm237, %v475, %v476
      %v481 = vsel %vm478, %v471, %v480
      %484 = vst [vmem:[#allocation2 + $0x60] sm:$0x33] %v479
      %485 = vst [vmem:[#allocation2 + $0x68] sm:$0x33] %v481
      %486 = vrot.lane.b32.xlu0 %v261, 118
      %v487 = vpop.permute.xlu0 %486
      %488 = vrot.lane.b32.xlu0 %v269, 118
      %v489 = vpop.permute.xlu0 %488
      %490 = vrot.lane.b32.xlu0 %v220, 118
      %v491 = vpop.permute.xlu0 %490
      %v492 = vrot.slane %v487, 4
      %v493 = vrot.slane %v489, 4
      %v494 = vrot.slane %v491, 4
      %v495 = vsel %vm237, %v492, %v493
      %vm496 = vcmask 965632
      %v497 = vsel %vm496, %v487, %v495
      %v498 = vsel %vm237, %v493, %v494
      %v499 = vsel %vm496, %v489, %v498
      %502 = vst [vmem:[#allocation2 + $0x60] sm:$0xcc] %v497
      %503 = vst [vmem:[#allocation2 + $0x68] sm:$0xcc] %v499
      %504 = vrot.lane.b32.xlu0 %v212, 58
      %v505 = vpop.permute.xlu0 %504
      %506 = vrot.lane.b32.xlu0 %v220, 58
      %v507 = vpop.permute.xlu0 %506
      %508 = vrot.lane.b32.xlu0 %v227, 58
      %v509 = vpop.permute.xlu0 %508
      %v510 = vrot.slane %v505, 4
      %v511 = vrot.slane %v507, 4
      %v512 = vrot.slane %v509, 4
      %v513 = vsel %vm237, %v510, %v511
      %v514 = vsel %vm424, %v505, %v513
      %v515 = vsel %vm237, %v511, %v512
      %v516 = vsel %vm424, %v507, %v515
      %519 = vst [vmem:[#allocation2 + $0x70] sm:$0x33] %v514
      %520 = vst [vmem:[#allocation2 + $0x78] sm:$0x33] %v516
      %521 = vrot.lane.b32.xlu0 %v269, 56
      %v522 = vpop.permute.xlu0 %521
      %v523 = vrot.slane %v522, 4
      %v524 = vsel %vm237, %v438, %v523
      %v525 = vsel %vm442, %v433, %v524
      %v526 = vsel %vm237, %v523, %v440
      %v527 = vsel %vm442, %v522, %v526
      %530 = vst [vmem:[#allocation2 + $0x70] sm:$0xcc] %v525
      %531 = vst [vmem:[#allocation2 + $0x78] sm:$0xcc] %v527
      %532 = vrot.lane.b32.xlu0 %v212, 54
      %v533 = vpop.permute.xlu0 %532
      %534 = vrot.lane.b32.xlu0 %v220, 54
      %v535 = vpop.permute.xlu0 %534
      %536 = vrot.lane.b32.xlu0 %v227, 54
      %v537 = vpop.permute.xlu0 %536
      %v538 = vrot.slane %v533, 4
      %v539 = vrot.slane %v535, 4
      %v540 = vrot.slane %v537, 4
      %v541 = vsel %vm237, %v538, %v539
      %v542 = vsel %vm460, %v533, %v541
      %v543 = vsel %vm237, %v539, %v540
      %v544 = vsel %vm460, %v535, %v543
      %547 = vst [vmem:[#allocation2 + $0x80] sm:$0x33] %v542
      %548 = vst [vmem:[#allocation2 + $0x88] sm:$0x33] %v544
      %549 = vrot.lane.b32.xlu0 %v254, 124
      %v550 = vpop.permute.xlu0 %549
      %551 = vrot.lane.b32.xlu0 %v261, 124
      %v552 = vpop.permute.xlu0 %551
      %553 = vrot.lane.b32.xlu0 %v269, 124
      %v554 = vpop.permute.xlu0 %553
      %v555 = vrot.slane %v550, 4
      %v556 = vrot.slane %v552, 4
      %v557 = vrot.slane %v554, 4
      %v558 = vsel %vm237, %v555, %v556
      %vm559 = vcmask 1014784
      %v560 = vsel %vm559, %v558, %v552
      %v561 = vsel %vm237, %v556, %v557
      %v562 = vsel %vm559, %v561, %v554
      %565 = vst [vmem:[#allocation2 + $0x80] sm:$0xcc] %v560
      %566 = vst [vmem:[#allocation2 + $0x88] sm:$0xcc] %v562
      %567 = vrot.lane.b32.xlu0 %v261, 120
      %v568 = vpop.permute.xlu0 %567
      %v569 = vrot.slane %v568, 4
      %v570 = vsel %vm237, %v569, %v234
      %v571 = vsel %vm239, %v570, %v229
      %v572 = vsel %vm239, %v238, %v231
      %575 = vst [vmem:[#allocation2 + $0x90] sm:$0x33] %v571
      %576 = vst [vmem:[#allocation2 + $0x98] sm:$0x33] %v572
      %577 = vrot.lane.b32.xlu0 %v254, 116
      %v578 = vpop.permute.xlu0 %577
      %579 = vrot.lane.b32.xlu0 %v261, 116
      %v580 = vpop.permute.xlu0 %579
      %581 = vrot.lane.b32.xlu0 %v269, 116
      %v582 = vpop.permute.xlu0 %581
      %v583 = vrot.slane %v578, 4
      %v584 = vrot.slane %v580, 4
      %v585 = vrot.slane %v582, 4
      %v586 = vsel %vm237, %v583, %v584
      %vm587 = vcmask 949248
      %v588 = vsel %vm587, %v586, %v580
      %v589 = vsel %vm237, %v584, %v585
      %v590 = vsel %vm587, %v589, %v582
      %593 = vst [vmem:[#allocation2 + $0x90] sm:$0xcc] %v588
      %594 = vst [vmem:[#allocation2 + $0x98] sm:$0xcc] %v590
      %595 = vrot.lane.b32.xlu0 %v212, 124
      %v596 = vpop.permute.xlu0 %595
      %597 = vrot.lane.b32.xlu0 %v220, 124
      %v598 = vpop.permute.xlu0 %597
      %599 = vrot.lane.b32.xlu0 %v227, 124
      %v600 = vpop.permute.xlu0 %599
      %v601 = vrot.slane %v596, 4
      %v602 = vrot.slane %v598, 4
      %v603 = vrot.slane %v600, 4
      %v604 = vsel %vm237, %v601, %v602
      %v605 = vsel %vm559, %v596, %v604
      %v606 = vsel %vm237, %v602, %v603
      %v607 = vsel %vm559, %v598, %v606
      %610 = vst [vmem:[#allocation2 + $0xa0] sm:$0x33] %v605
      %611 = vst [vmem:[#allocation2 + $0xa8] sm:$0x33] %v607
      %612 = vrot.lane.b32.xlu0 %v220, 116
      %v613 = vpop.permute.xlu0 %612
      %v614 = vrot.slane %v613, 4
      %v615 = vsel %vm587, %v580, %v589
      %v616 = vsel %vm237, %v585, %v614
      %v617 = vsel %vm587, %v582, %v616
      %620 = vst [vmem:[#allocation2 + $0xa0] sm:$0xcc] %v615
      %621 = vst [vmem:[#allocation2 + $0xa8] sm:$0xcc] %v617
      %v622 = vsel %vm559, %v604, %v598
      %v623 = vsel %vm559, %v606, %v600
      %626 = vst [vmem:[#allocation2 + $0xb0] sm:$0x33] %v622
      %627 = vst [vmem:[#allocation2 + $0xb8] sm:$0x33] %v623
      %628 = vrot.lane.b32.xlu0 %v269, 120
      %v629 = vpop.permute.xlu0 %628
      %v630 = vrot.slane %v629, 4
      %v631 = vsel %vm237, %v569, %v630
      %v632 = vsel %vm239, %v631, %v629
      %v633 = vsel %vm237, %v630, %v235
      %v634 = vsel %vm239, %v633, %v231
      %637 = vst [vmem:[#allocation2 + $0xb0] sm:$0xcc] %v632
      %638 = vst [vmem:[#allocation2 + $0xb8] sm:$0xcc] %v634
      %639 = vrot.lane.b32.xlu0 %v212, 116
      %v640 = vpop.permute.xlu0 %639
      %641 = vrot.lane.b32.xlu0 %v227, 116
      %v642 = vpop.permute.xlu0 %641
      %v643 = vrot.slane %v640, 4
      %v644 = vrot.slane %v642, 4
      %v645 = vsel %vm237, %v643, %v614
      %v646 = vsel %vm587, %v645, %v613
      %v647 = vsel %vm237, %v614, %v644
      %v648 = vsel %vm587, %v647, %v642
      %651 = vst [vmem:[#allocation2 + $0xc0] sm:$0x33] %v646
      %652 = vst [vmem:[#allocation2 + $0xc8] sm:$0x33] %v648
      %655 = vst [vmem:[#allocation2 + $0xc0] sm:$0xcc] %v254
      %656 = vst [vmem:[#allocation2 + $0xc8] sm:$0xcc] %v261
      %v657 = vsel %vm239, %v568, %v570
      %659 = vst [vmem:[#allocation2 + $0xd0] sm:$0x33] %v657
      %660 = vst [vmem:[#allocation2 + $0xd8] sm:$0x33] %v240
      %661 = vrot.lane.b32.xlu0 %v254, 112
      %v662 = vpop.permute.xlu0 %661
      %663 = vrot.lane.b32.xlu0 %v261, 112
      %v664 = vpop.permute.xlu0 %663
      %665 = vrot.lane.b32.xlu0 %v269, 112
      %v666 = vpop.permute.xlu0 %665
      %v667 = vrot.slane %v662, 4
      %v668 = vrot.slane %v664, 4
      %v669 = vrot.slane %v666, 4
      %v670 = vsel %vm237, %v667, %v668
      %vm671 = vcmask 916480
      %v672 = vsel %vm671, %v662, %v670
      %v673 = vsel %vm237, %v668, %v669
      %v674 = vsel %vm671, %v664, %v673
      %677 = vst [vmem:[#allocation2 + $0xd0] sm:$0xcc] %v672
      %678 = vst [vmem:[#allocation2 + $0xd8] sm:$0xcc] %v674
      %681 = vst [vmem:[#allocation2 + $0xe0] sm:$0x33] %v212
      %682 = vst [vmem:[#allocation2 + $0xe8] sm:$0x33] %v220
      %683 = vrot.lane.b32.xlu0 %v220, 112
      %v684 = vpop.permute.xlu0 %683
      %v685 = vrot.slane %v684, 4
      %v686 = vsel %vm237, %v669, %v685
      %v687 = vsel %vm671, %v666, %v686
      %689 = vst [vmem:[#allocation2 + $0xe0] sm:$0xcc] %v674
      %690 = vst [vmem:[#allocation2 + $0xe8] sm:$0xcc] %v687
      %692 = vst [vmem:[#allocation2 + $0xf0] sm:$0x33] %v220
      %693 = vst [vmem:[#allocation2 + $0xf8] sm:$0x33] %v227
      %v695 = vcombine.low %v202, %v202
      %v697 = vunpack.c.l.s4 1983009808
      %v698 = vunpack.c.0.s8 %v697
      %v699 = vlaneseq
      %v700 = vshrl.u32 %v699, 7
      %v701 = vsub.s32 %v698, %v700
      %v702 = vrot.slane %v695, %v701
      %703 = vrot.lane.b32.xlu0 %v702, 120
      %v704 = vpop.permute.xlu0 %703
      %v705 = vrot.slane %v704, 4
      %v706 = vsel %vm239, %v629, %v633
      %v707 = vsel %vm237, %v235, %v705
      %v708 = vsel %vm239, %v231, %v707
      %711 = vst [vmem:[#allocation2 + $0xf0] sm:$0xcc] %v706
      %712 = vst [vmem:[#allocation2 + $0xf8] sm:$0xcc] %v708
      %v714 = vunpack.c.l.s4 1983009808
      %v715 = vunpack.c.0.s8 %v714
      %v716 = vlaneseq
      %v717 = vshrl.u32 %v716, 7
      %v718 = vsub.s32 %v715, %v717
      %v719 = vrot.slane %v202, %v718
      %720 = vrot.lane.b32.xlu0 %v227, 112
      %v721 = vpop.permute.xlu0 %720
      %722 = vrot.lane.b32.xlu0 %v719, 112
      %v723 = vpop.permute.xlu0 %722
      %v724 = vrot.slane %v721, 4
      %v725 = vrot.slane %v723, 4
      %v726 = vsel %vm237, %v685, %v724
      %v727 = vsel %vm671, %v684, %v726
      %v728 = vsel %vm237, %v724, %v725
      %v729 = vsel %vm671, %v721, %v728
      %732 = vst [vmem:[#allocation2 + $0x100] sm:$0x33] %v727
      %733 = vst [vmem:[#allocation2 + $0x108] sm:$0x33] %v729
      %v734 = vld [vmem:[%s1] sm:$0xf]
      %v735 = vld [vmem:[#allocation2] sm:$0xff]
      %v736 = vld [vmem:[#allocation2 + $0x8] sm:$0xff]
      %v737 = vld [vmem:[#allocation2 + $0x10] sm:$0xff]
      %v738 = vld [vmem:[#allocation2 + $0x18] sm:$0xff]
      %v739 = vld [vmem:[#allocation2 + $0x20] sm:$0xff]
      %v740 = vld [vmem:[#allocation2 + $0x28] sm:$0xff]
      %v741 = vld [vmem:[#allocation2 + $0x30] sm:$0xff]
      %v742 = vld [vmem:[#allocation2 + $0x38] sm:$0xff]
      %v743 = vld [vmem:[#allocation2 + $0x40] sm:$0xff]
      %v744 = vld [vmem:[#allocation2 + $0x48] sm:$0xff]
      %v745 = vld [vmem:[#allocation2 + $0x50] sm:$0xff]
      %v746 = vld [vmem:[#allocation2 + $0x58] sm:$0xff]
      %v747 = vld [vmem:[#allocation2 + $0x60] sm:$0xff]
      %v748 = vld [vmem:[#allocation2 + $0x68] sm:$0xff]
      %v749 = vld [vmem:[#allocation2 + $0x70] sm:$0xff]
      %v750 = vld [vmem:[#allocation2 + $0x78] sm:$0xff]
      %v751 = vld [vmem:[#allocation2 + $0x80] sm:$0xff]
      %v752 = vld [vmem:[#allocation2 + $0x88] sm:$0xff]
      %v753 = vld [vmem:[#allocation2 + $0x90] sm:$0xff]
      %v754 = vld [vmem:[#allocation2 + $0x98] sm:$0xff]
      %v755 = vld [vmem:[#allocation2 + $0xa0] sm:$0xff]
      %v756 = vld [vmem:[#allocation2 + $0xa8] sm:$0xff]
      %v757 = vld [vmem:[#allocation2 + $0xb0] sm:$0xff]
      %v758 = vld [vmem:[#allocation2 + $0xb8] sm:$0xff]
      %v759 = vld [vmem:[#allocation2 + $0xc0] sm:$0xff]
      %v760 = vld [vmem:[#allocation2 + $0xc8] sm:$0xff]
      %v761 = vld [vmem:[#allocation2 + $0xd0] sm:$0xff]
      %v762 = vld [vmem:[#allocation2 + $0xd8] sm:$0xff]
      %v763 = vld [vmem:[#allocation2 + $0xe0] sm:$0xff]
      %v764 = vld [vmem:[#allocation2 + $0xe8] sm:$0xff]
      %v765 = vld [vmem:[#allocation2 + $0xf0] sm:$0xff]
      %v766 = vld [vmem:[#allocation2 + $0xf8] sm:$0xff]
      %v767 = vld [vmem:[#allocation2 + $0x100] sm:$0x33]
      %v768 = vld [vmem:[#allocation2 + $0x108] sm:$0x33]
      %v769 = vld [vmem:[%s2] sm:$0xf]
      %771 = vset.pattern.permute.xlu0 0
      %772 = vperm.xlu0 %771, %v769
      %v773 = vpop.permute.xlu0 %772
      %v777 = vunpack.c.l.s4 1983009808
      %v778 = vunpack.c.0.s8 %v777
      %v779 = vlaneseq
      %v780 = vshrl.u32 %v779, 7
      %v781 = vsub.s32 %v778, %v780
      %v782 = vrot.slane %v734, %v781
      %v783 = vcombine.high %v782, %v782
      %v819 = vunpack.c.l.b16 %v735
      %v820 = vunpack.c.h.b16 %v735
      %v821 = vunpack.c.l.b16 %v736
      %v822 = vunpack.c.h.b16 %v736
      %v823 = vunpack.c.l.b16 %v737
      %v824 = vunpack.c.h.b16 %v737
      %v825 = vunpack.c.l.b16 %v738
      %v826 = vunpack.c.h.b16 %v738
      %v827 = vunpack.c.l.b16 %v739
      %v828 = vunpack.c.h.b16 %v739
      %v829 = vunpack.c.l.b16 %v740
      %v830 = vunpack.c.h.b16 %v740
      %v831 = vunpack.c.l.b16 %v741
      %v832 = vunpack.c.h.b16 %v741
      %v833 = vunpack.c.l.b16 %v742
      %v834 = vunpack.c.h.b16 %v742
      %v835 = vunpack.c.l.b16 %v743
      %v836 = vunpack.c.h.b16 %v743
      %v837 = vunpack.c.l.b16 %v744
      %v838 = vunpack.c.h.b16 %v744
      %v839 = vunpack.c.l.b16 %v745
      %v840 = vunpack.c.h.b16 %v745
      %v841 = vunpack.c.l.b16 %v746
      %v842 = vunpack.c.h.b16 %v746
      %v843 = vunpack.c.l.b16 %v747
      %v844 = vunpack.c.h.b16 %v747
      %v845 = vunpack.c.l.b16 %v748
      %v846 = vunpack.c.h.b16 %v748
      %v847 = vunpack.c.l.b16 %v749
      %v848 = vunpack.c.h.b16 %v749
      %v849 = vunpack.c.l.b16 %v750
      %v850 = vunpack.c.h.b16 %v750
      %v851 = vunpack.c.l.b16 %v751
      %v852 = vunpack.c.h.b16 %v751
      %v853 = vunpack.c.l.b16 %v752
      %v854 = vunpack.c.h.b16 %v752
      %v855 = vunpack.c.l.b16 %v753
      %v856 = vunpack.c.h.b16 %v753
      %v857 = vunpack.c.l.b16 %v754
      %v858 = vunpack.c.h.b16 %v754
      %v859 = vunpack.c.l.b16 %v755
      %v860 = vunpack.c.h.b16 %v755
      %v861 = vunpack.c.l.b16 %v756
      %v862 = vunpack.c.h.b16 %v756
      %v863 = vunpack.c.l.b16 %v757
      %v864 = vunpack.c.h.b16 %v757
      %v865 = vunpack.c.l.b16 %v758
      %v866 = vunpack.c.h.b16 %v758
      %v867 = vunpack.c.l.b16 %v759
      %v868 = vunpack.c.h.b16 %v759
      %v869 = vunpack.c.l.b16 %v760
      %v870 = vunpack.c.h.b16 %v760
      %v871 = vunpack.c.l.b16 %v761
      %v872 = vunpack.c.h.b16 %v761
      %v873 = vunpack.c.l.b16 %v762
      %v874 = vunpack.c.h.b16 %v762
      %v875 = vunpack.c.l.b16 %v763
      %v876 = vunpack.c.h.b16 %v763
      %v877 = vunpack.c.l.b16 %v764
      %v878 = vunpack.c.h.b16 %v764
      %v879 = vunpack.c.l.b16 %v765
      %v880 = vunpack.c.h.b16 %v765
      %v881 = vunpack.c.l.b16 %v766
      %v882 = vunpack.c.h.b16 %v766
      %v883 = vunpack.c.l.b16 %v767
      %v884 = vunpack.c.h.b16 %v767
      %v885 = vunpack.c.l.b16 %v768
      %v886 = vunpack.c.h.b16 %v768
      %v887 = vpack.c.b16 %v823, %v819
      %v888 = vpack.c.b16 %v824, %v820
      %v889 = vpack.c.b16 %v825, %v821
      %v890 = vpack.c.b16 %v826, %v822
      %v891 = vpack.c.b16 %v831, %v827
      %v892 = vpack.c.b16 %v832, %v828
      %v893 = vpack.c.b16 %v833, %v829
      %v894 = vpack.c.b16 %v834, %v830
      %v895 = vpack.c.b16 %v839, %v835
      %v896 = vpack.c.b16 %v840, %v836
      %v897 = vpack.c.b16 %v841, %v837
      %v898 = vpack.c.b16 %v842, %v838
      %v899 = vpack.c.b16 %v847, %v843
      %v900 = vpack.c.b16 %v848, %v844
      %v901 = vpack.c.b16 %v849, %v845
      %v902 = vpack.c.b16 %v850, %v846
      %v903 = vpack.c.b16 %v855, %v851
      %v904 = vpack.c.b16 %v856, %v852
      %v905 = vpack.c.b16 %v857, %v853
      %v906 = vpack.c.b16 %v858, %v854
      %v907 = vpack.c.b16 %v863, %v859
      %v908 = vpack.c.b16 %v864, %v860
      %v909 = vpack.c.b16 %v865, %v861
      %v910 = vpack.c.b16 %v866, %v862
      %v911 = vpack.c.b16 %v871, %v867
      %v912 = vpack.c.b16 %v872, %v868
      %v913 = vpack.c.b16 %v873, %v869
      %v914 = vpack.c.b16 %v874, %v870
      %v915 = vpack.c.b16 %v879, %v875
      %v916 = vpack.c.b16 %v880, %v876
      %v917 = vpack.c.b16 %v881, %v877
      %v918 = vpack.c.b16 %v882, %v878
      %v919 = vpack.c.b16 %v883, %v883
      %v920 = vpack.c.b16 %v884, %v884
      %v921 = vpack.c.b16 %v885, %v885
      %v922 = vpack.c.b16 %v886, %v886
      %vm955 = vcmask 31744
      %v957 = vsel %vm955, %v783, 0
      %vm959 = vcmask 1041408
      %v961 = vsel %vm959, %v919, 0
      %v964 = vsel %vm959, %v920, 0
      %v967 = vsel %vm959, %v921, 0
      %v970 = vsel %vm959, %v922, 0
      %972 = vmatprep.subr.bf16.mxu0 %v888
      %973 = vmatpush1.bf16.msra.mxu0 %v887
      %974 = vmatprep.subr.bf16.mxu0 %v892
      %975 = vmatpush1.bf16.msra.mxu0 %v891
      %976 = vmatprep.subr.bf16.mxu0 %v896
      %977 = vmatpush1.bf16.msra.mxu0 %v895
      %978 = vmatprep.subr.bf16.mxu0 %v900
      %979 = vmatpush1.bf16.msra.mxu0 %v899
      %980 = vmatprep.subr.bf16.mxu0 %v904
      %981 = vmatpush1.bf16.msra.mxu0 %v903
      %982 = vmatprep.subr.bf16.mxu0 %v908
      %983 = vmatpush1.bf16.msra.mxu0 %v907
      %984 = vmatprep.subr.bf16.mxu0 %v912
      %985 = vmatpush1.bf16.msra.mxu0 %v911
      %986 = vmatprep.subr.bf16.mxu0 %v916
      %987 = vmatpush1.bf16.msra.mxu0 %v915
      %988 = vmatprep.subr.bf16.mxu0 %v964
      %989 = vmatpush1.bf16.msra.mxu0 %v961
      %990 = vmatprep.subr.bf16.mxu0 0
      %991 = vmatpush1.bf16.msra.mxu0 0
      %992 = vmatprep.subr.bf16.mxu0 0
      %993 = vmatpush1.bf16.msra.mxu0 0
      %994 = vmatprep.subr.bf16.mxu0 0
      %995 = vmatpush1.bf16.msra.mxu0 0
      %996 = vmatprep.subr.bf16.mxu0 0
      %997 = vmatpush1.bf16.msra.mxu0 0
      %998 = vmatprep.subr.bf16.mxu0 0
      %999 = vmatpush1.bf16.msra.mxu0 0
      %1000 = vmatprep.subr.bf16.mxu0 0
      %1001 = vmatpush1.bf16.msra.mxu0 0
      %1002 = vmatprep.subr.bf16.mxu0 0
      %1003 = vmatpush1.bf16.msra.mxu0 0
      %1004 = vmatprep.mubr.bf16.mxu0 %v957
      %1005 = vmatmul.mubr.bf16.gmra.mrb[0].mxu0 %v782
      %v1006 = vpop.f32.mrb[0].mxu0
      %v1007 = vadd.f32 %v773, %v1006
      %v1008 = vpop.f32.mrb[0].mxu0
      %v1009 = vadd.f32 %v773, %v1008
      %v1010 = vpop.f32.mrb[0].mxu0
      %v1011 = vpop.f32.mrb[0].mxu0
      %1012 = vdwg.mxu0
      %1013 = vmatprep.subr.bf16.mxu0 %v890
      %1014 = vmatpush1.bf16.msra.mxu0 %v889
      %1015 = vmatprep.subr.bf16.mxu0 %v894
      %1016 = vmatpush1.bf16.msra.mxu0 %v893
      %1017 = vmatprep.subr.bf16.mxu0 %v898
      %1018 = vmatpush1.bf16.msra.mxu0 %v897
      %1019 = vmatprep.subr.bf16.mxu0 %v902
      %1020 = vmatpush1.bf16.msra.mxu0 %v901
      %1021 = vmatprep.subr.bf16.mxu0 %v906
      %1022 = vmatpush1.bf16.msra.mxu0 %v905
      %1023 = vmatprep.subr.bf16.mxu0 %v910
      %1024 = vmatpush1.bf16.msra.mxu0 %v909
      %1025 = vmatprep.subr.bf16.mxu0 %v914
      %1026 = vmatpush1.bf16.msra.mxu0 %v913
      %1027 = vmatprep.subr.bf16.mxu0 %v918
      %1028 = vmatpush1.bf16.msra.mxu0 %v917
      %1029 = vmatprep.subr.bf16.mxu0 %v970
      %1030 = vmatpush1.bf16.msra.mxu0 %v967
      %1031 = vmatprep.subr.bf16.mxu0 0
      %1032 = vmatpush1.bf16.msra.mxu0 0
      %1033 = vmatprep.subr.bf16.mxu0 0
      %1034 = vmatpush1.bf16.msra.mxu0 0
      %1035 = vmatprep.subr.bf16.mxu0 0
      %1036 = vmatpush1.bf16.msra.mxu0 0
      %1037 = vmatprep.subr.bf16.mxu0 0
      %1038 = vmatpush1.bf16.msra.mxu0 0
      %1039 = vmatprep.subr.bf16.mxu0 0
      %1040 = vmatpush1.bf16.msra.mxu0 0
      %1041 = vmatprep.subr.bf16.mxu0 0
      %1042 = vmatpush1.bf16.msra.mxu0 0
      %1043 = vmatprep.subr.bf16.mxu0 0
      %1044 = vmatpush1.bf16.msra.mxu0 0
      %1045 = vmatprep.mubr.bf16.mxu0 %v957
      %1046 = vmatmul.mubr.bf16.gmra.mrb[0].mxu0 %v782
      %v1047 = vpop.f32.mrb[0].mxu0
      %v1048 = vadd.f32 %v773, %v1047
      %v1049 = vpop.f32.mrb[0].mxu0
      %v1050 = vadd.f32 %v773, %v1049
      %v1051 = vpop.f32.mrb[0].mxu0
      %v1052 = vpop.f32.mrb[0].mxu0
      %1053 = vdwg.mxu0
      %v1058 = vcombine.low %v1007, %v1009
      %v1059 = vcombine.low %v1048, %v1050
      %1062 = vst [vmem:[%s192] sm:$0xff] %v1058
      %1063 = vst [vmem:[%s192 + $0x8] sm:$0xff] %v1059
      %s1064 = smul.u32 4, %s19
      %p1065 = scmp.lt.s32.totalorder %s18, 1
      %s1066 = scalar_select %p1065, %s18, 1
      %p1067 = scmp.lt.s32.totalorder %s1064, 3
      %s1068 = scalar_select %p1067, %s1064, 3
      %s1069 = smul.addr %s1066, 4
      %s1070 = sadd.s32 %s1068, %s1069
      %s1071 = smul.addr %s1070, 4
      %s1072 = scalar_lea.vmem %s3, %s1071
      // Predicated region
      $region33: #{large_conv_pallas.1} parent=31 // pred_check
        %p1073 = pneg %p114
      $region34: #{large_conv_pallas.1} parent=31 // pred_check_branch
        %1075 = sbr.rel (%p1073) target = $region36
      $region35: #{large_conv_pallas.1} parent=31 // pred_region
        %s1076 = smul.u32 4, %s19
      $region36: #{large_conv_pallas.1} parent=31 // pred_fallthru
        _
    $region32: #{large_conv_pallas.1} parent=5 // pred_fallthru
      _
    %p1077 = scmp.le.s32.totalorder 2, %s9
    // Predicated region
    $region37: #{large_conv_pallas.1} parent=5 // pred_check
      %p1078 = pneg %p1077
    $region38: #{large_conv_pallas.1} parent=5 // pred_check_branch
      %1080 = sbr.rel (%p1078) target = $region40
    $region39: #{large_conv_pallas.1} parent=5 // pred_region
      %s1081 = ssub.s32 %s9, 2
      // Predicated region
      $region41: #{large_conv_pallas.1} parent=39 // pred_check
        %p1082 = pneg %p120
      $region42: #{large_conv_pallas.1} parent=39 // pred_check_branch
        %1084 = sbr.rel (%p1082) target = $region44
      $region43: #{large_conv_pallas.1} parent=39 // pred_region
        %s1085 = smul.u32 4, %s21
        %p1086 = scmp.lt.s32.totalorder %s20, 1
        %s1087 = scalar_select %p1086, %s20, 1
        %p1088 = scmp.lt.s32.totalorder %s1085, 3
        %s1089 = scalar_select %p1088, %s1085, 3
        %s1090 = smul.addr %s1087, 4
        %s1091 = sadd.s32 %s1089, %s1090
        %s1092 = smul.addr %s1091, 4
        %s1093 = scalar_lea.vmem %s3, %s1092
      $region44: #{large_conv_pallas.1} parent=39 // pred_fallthru
        _
    $region40: #{large_conv_pallas.1} parent=5 // pred_fallthru
      _
  $region6: #{large_conv_pallas.1} parent=0 // loop_footer
    %s13 = sadd.s32 1, %s9
  $region7: #{large_conv_pallas.1} parent=0 // loop_footer_branch
    %8 = sbr.rel target = $region3
  $region8: #{large_conv_pallas.1} parent=0 // loop_exit
    _

</llo_original>
